<compile_context>
chip_gen: v5e
topology: v5e:2x2
jax: 0.10.0
libtpu: 0.0.40
codegen_flags: <defaults>
</compile_context>

<pallas_src>
import math

import jax
import jax.numpy as jnp
from jax import lax
from jax.experimental import pallas as pl
from jax.experimental.pallas import tpu as pltpu


# ----------------------------- Pallas kernels ------------------------------

def _contract(x, w):
    # (tm, tk) x (tn, tk) -> (tm, tn): contract over in_features directly from the
    # (out, in) weight layout (no transpose), f32 accumulation on the MXU.
    return lax.dot_general(x, w,
                           dimension_numbers=(((1,), (1,)), ((), ())),
                           preferred_element_type=jnp.float32)


def _train_fullk_kernel(x_ref, wmu_ref, wsig_ref, ein_ref, eout_ref, b_ref, o_ref):
    # Rank-1 factorised noise reconstructed on the VPU (hidden under DMA/MXU).
    w = wmu_ref[...] + wsig_ref[...] * (eout_ref[...] * ein_ref[...])
    o_ref[...] = (_contract(x_ref[...], w) + b_ref[...]).astype(o_ref.dtype)


def _train_ktiled_kernel(x_ref, wmu_ref, wsig_ref, ein_ref, eout_ref, b_ref,
                         o_ref, acc_ref):
    k = pl.program_id(2)

    @pl.when(k == 0)
    def _():
        acc_ref[...] = jnp.zeros_like(acc_ref)

    w = wmu_ref[...] + wsig_ref[...] * (eout_ref[...] * ein_ref[...])
    acc_ref[...] += _contract(x_ref[...], w)

    @pl.when(k == pl.num_programs(2) - 1)
    def _():
        o_ref[...] = (acc_ref[...] + b_ref[...]).astype(o_ref.dtype)


def _eval_fullk_kernel(x_ref, wmu_ref, b_ref, o_ref):
    o_ref[...] = (_contract(x_ref[...], wmu_ref[...]) + b_ref[...]).astype(o_ref.dtype)


def _eval_ktiled_kernel(x_ref, wmu_ref, b_ref, o_ref, acc_ref):
    k = pl.program_id(2)

    @pl.when(k == 0)
    def _():
        acc_ref[...] = jnp.zeros_like(acc_ref)

    acc_ref[...] += _contract(x_ref[...], wmu_ref[...])

    @pl.when(k == pl.num_programs(2) - 1)
    def _():
        o_ref[...] = (acc_ref[...] + b_ref[...]).astype(o_ref.dtype)


# ------------------------------ Python wrapper ------------------------------

def _round_up(x, m):
    return ((x + m - 1) // m) * m


def _pad2(a, rows, cols, dtype=None):
    pr, pc = rows - a.shape[0], cols - a.shape[1]
    if pr or pc:
        a = jnp.pad(a, ((0, pr), (0, pc)))
    return a if dtype is None else a.astype(dtype)


def noisy_layer_forward(x, params, training=True, *, tm=256, tn=256, tk=2048,
                        compute_dtype=jnp.bfloat16):
    """NoisyLayer forward pass via a tiled Pallas matmul.

    x:      (B, in_features) float32
    params: dict with weight_mu/weight_sigma (out, in), weight_eps_in (in,),
            weight_eps_out (out,), bias_mu/bias_sigma/bias_epsilon (out,)
    """
    B, in_f = x.shape
    out_f = params["weight_mu"].shape[0]

    # --- tile selection -----------------------------------------------------
    # bf16 sublane packing is 16 rows -> keep the M tile a multiple of 16.
    tm = max(16, min(tm, _round_up(B, 16)))
    tm = _round_up(tm, 16)

    Np0 = _round_up(out_f, 128)
    Kp0 = _round_up(in_f, 128)

    tn = min(tn, Np0)
    # v7x has 2 TensorCores: when there is only one M block, keep >= 2 blocks on
    # the (parallel) N axis so both cores get work. No-op on v5e/v6e (1 TC).
    if Np0 // tn < 2 and Np0 >= 256 and _round_up(B, tm) // tm < 2:
        tn = 128

    tk = min(tk, Kp0)
    full_k = tk >= Kp0
    if full_k:
        tk = Kp0

    Bp = _round_up(B, tm)
    Np = _round_up(Np0, tn)
    Kp = Kp0 if full_k else _round_up(Kp0, tk)

    # --- operand padding & streaming dtype -----------------------------------
    # Zero padding contributes nothing to the contraction; padded rows/cols of
    # the output are sliced off below.  bf16 streaming, f32 accumulation.
    x_p = _pad2(x, Bp, Kp, compute_dtype)
    wmu_p = _pad2(params["weight_mu"], Np, Kp, compute_dtype)

    # Fold the bias once in the wrapper (O(out) XLA work) -> single (1, Np) stream.
    if training:
        bias = params["bias_mu"] + params["bias_sigma"] * params["bias_epsilon"]
    else:
        bias = params["bias_mu"]
    b_p = _pad2(bias.reshape(1, -1).astype(jnp.float32), 1, Np)

    # --- BlockSpecs / grid ----------------------------------------------------
    if full_k:
        grid = (Bp // tm, Np // tn)
        x_spec = pl.BlockSpec((tm, tk), lambda i, j: (i, 0))
        w_spec = pl.BlockSpec((tn, tk), lambda i, j: (j, 0))
        ein_spec = pl.BlockSpec((1, tk), lambda i, j: (0, 0))
        eout_spec = pl.BlockSpec((tn, 1), lambda i, j: (j, 0))
        b_spec = pl.BlockSpec((1, tn), lambda i, j: (0, j))
        out_spec = pl.BlockSpec((tm, tn), lambda i, j: (i, j))
        scratch = []
        semantics = ("parallel", "parallel")
    else:
        grid = (Bp // tm, Np // tn, Kp // tk)
        x_spec = pl.BlockSpec((tm, tk), lambda i, j, k: (i, k))
        w_spec = pl.BlockSpec((tn, tk), lambda i, j, k: (j, k))
        ein_spec = pl.BlockSpec((1, tk), lambda i, j, k: (0, k))
        eout_spec = pl.BlockSpec((tn, 1), lambda i, j, k: (j, 0))
        b_spec = pl.BlockSpec((1, tn), lambda i, j, k: (0, j))
        out_spec = pl.BlockSpec((tm, tn), lambda i, j, k: (i, j))
        scratch = [pltpu.VMEM((tm, tn), jnp.float32)]
        semantics = ("parallel", "parallel", "arbitrary")

    # --- VMEM budget: past v5e's 16 MiB scoped default, under v7x's 64 MiB ---
    cb = jnp.dtype(compute_dtype).itemsize
    n_w = 2 if training else 1
    in_tile = tm * tk * cb + n_w * tn * tk * cb + tk * cb + tn * cb + tn * 4
    out_tile = tm * tn * x.dtype.itemsize
    acc_tile = 0 if full_k else tm * tn * 4
    vmem_limit = min(64 << 20, 2 * (in_tile + out_tile) + acc_tile + (16 << 20))

    cparams = pltpu.CompilerParams(dimension_semantics=semantics,
                                   vmem_limit_bytes=int(vmem_limit))
    out_shape = jax.ShapeDtypeStruct((Bp, Np), x.dtype)

    if training:
        wsig_p = _pad2(params["weight_sigma"], Np, Kp, compute_dtype)
        ein_p = _pad2(params["weight_eps_in"].reshape(1, -1), 1, Kp, compute_dtype)
        eout_p = _pad2(params["weight_eps_out"].reshape(-1, 1), Np, 1, compute_dtype)
        kernel = _train_fullk_kernel if full_k else _train_ktiled_kernel
        in_specs = [x_spec, w_spec, w_spec, ein_spec, eout_spec, b_spec]
        args = (x_p, wmu_p, wsig_p, ein_p, eout_p, b_p)
    else:
        kernel = _eval_fullk_kernel if full_k else _eval_ktiled_kernel
        in_specs = [x_spec, w_spec, b_spec]
        args = (x_p, wmu_p, b_p)

    y_p = pl.pallas_call(
        kernel,
        out_shape=out_shape,
        grid_spec=pltpu.PrefetchScalarGridSpec(
            num_scalar_prefetch=0,
            grid=grid,
            in_specs=in_specs,
            out_specs=out_spec,
            scratch_shapes=scratch),
        compiler_params=cparams,
    )(*args)

    return y_p[:B, :out_f]


# ----------------------- Deterministic parameter init ----------------------

def scale_noise(key, size):
    # torch: x = randn(size); return x.sign() * x.abs().sqrt()
    x = jax.random.normal(key, (size,), dtype=jnp.float32)
    return jnp.sign(x) * jnp.sqrt(jnp.abs(x))


def init_noisy_layer(key, in_features, out_features, std_init=0.1):
    k_wmu, k_bmu, k_ein, k_eout = jax.random.split(key, 4)
    mu_range = 1.0 / math.sqrt(in_features)

    weight_mu = jax.random.uniform(k_wmu, (out_features, in_features),
                                   minval=-mu_range, maxval=mu_range,
                                   dtype=jnp.float32)
    weight_sigma = jnp.full((out_features, in_features),
                            std_init / math.sqrt(in_features), dtype=jnp.float32)
    bias_mu = jax.random.uniform(k_bmu, (out_features,),
                                 minval=-mu_range, maxval=mu_range,
                                 dtype=jnp.float32)
    bias_sigma = jnp.full((out_features,),
                          std_init / math.sqrt(out_features), dtype=jnp.float32)

    eps_in = scale_noise(k_ein, in_features)     # (in,)
    eps_out = scale_noise(k_eout, out_features)  # (out,)

    # Factorised noise kept in rank-1 form; the dense (out, in) epsilon matrix is
    # never stored or streamed.
    return {
        "weight_mu": weight_mu,
        "weight_sigma": weight_sigma,
        "weight_eps_in": eps_in,
        "weight_eps_out": eps_out,
        "bias_mu": bias_mu,
        "bias_sigma": bias_sigma,
        "bias_epsilon": eps_out,     # same as PyTorch: bias_epsilon = eps_out
    }


# ------------------------------ Pure-JAX reference --------------------------

def noisy_layer_ref(x, p, training=True):
    if training:
        w_eps = jnp.outer(p["weight_eps_out"], p["weight_eps_in"])
        w = p["weight_mu"] + p["weight_sigma"] * w_eps
        b = p["bias_mu"] + p["bias_sigma"] * p["bias_epsilon"]
    else:
        w, b = p["weight_mu"], p["bias_mu"]
    return x @ w.T + b


# ------------------------------------ main ----------------------------------

if __name__ == "__main__":
    key = jax.random.PRNGKey(0)
    k_param, k_x, k_param2, k_x2 = jax.random.split(key, 4)

    # Small shapes consistent with the module.  bf16 streaming -> tolerances are
    # loosened vs the f32 reference.
    batch, in_features, out_features = 8, 32, 16
    params = init_noisy_layer(k_param, in_features, out_features, std_init=0.1)
    x = jax.random.normal(k_x, (batch, in_features), dtype=jnp.float32)

    y_train = jax.block_until_ready(noisy_layer_forward(x, params, training=True))
    y_eval = jax.block_until_ready(noisy_layer_forward(x, params, training=False))

    assert jnp.allclose(y_train, noisy_layer_ref(x, params, training=True),
                        atol=2e-2, rtol=2e-2)
    assert jnp.allclose(y_eval, noisy_layer_ref(x, params, training=False),
                        atol=2e-2, rtol=2e-2)

    # Larger case: exercises ragged padding (144 -> 256 out), the >=2-N-tile
    # (v7x megacore) path, the full-K single-step path, and (with tk=256 forced)
    # the multi-step K reduction / accumulator path.
    batch2, in2, out2 = 24, 640, 144
    params2 = init_noisy_layer(k_param2, in2, out2, std_init=0.1)
    x2 = jax.random.normal(k_x2, (batch2, in2), dtype=jnp.float32)

    y2_train = jax.block_until_ready(noisy_layer_forward(x2, params2, training=True))
    y2_eval = jax.block_until_ready(noisy_layer_forward(x2, params2, training=False))
    y2_train_kt = jax.block_until_ready(
        noisy_layer_forward(x2, params2, training=True, tk=256))
    y2_eval_kt = jax.block_until_ready(
        noisy_layer_forward(x2, params2, training=False, tk=256))

    r2_train = noisy_layer_ref(x2, params2, training=True)
    r2_eval = noisy_layer_ref(x2, params2, training=False)
    assert jnp.allclose(y2_train, r2_train, atol=3e-2, rtol=3e-2)
    assert jnp.allclose(y2_eval, r2_eval, atol=3e-2, rtol=3e-2)
    assert jnp.allclose(y2_train_kt, r2_train, atol=3e-2, rtol=3e-2)
    assert jnp.allclose(y2_eval_kt, r2_eval, atol=3e-2, rtol=3e-2)

    print("KERNEL_OK")
</pallas_src>

<mosaic_0001>
module attributes {stable_mosaic.version = 11 : i64} {
  func.func @_train_fullk_kernel(%arg0: i32, %arg1: i32, %arg2: memref<16x128xbf16, #tpu.memory_space<vmem>>, %arg3: memref<128x128xbf16, #tpu.memory_space<vmem>>, %arg4: memref<128x128xbf16, #tpu.memory_space<vmem>>, %arg5: memref<1x128xbf16, #tpu.memory_space<vmem>>, %arg6: memref<128x1xbf16, #tpu.memory_space<vmem>>, %arg7: memref<1x128xf32, #tpu.memory_space<vmem>>, %arg8: memref<16x128xf32, #tpu.memory_space<vmem>>) attributes {dimension_semantics = [#tpu.dimension_semantics<parallel>, #tpu.dimension_semantics<parallel>], iteration_bounds = array<i64: 1, 1>, scalar_prefetch = 0 : i64, scratch_operands = 0 : i64, tpu.core_type = #tpu.core_type<tc>, window_params = [{transform_indices = @transform_0, window_bounds = array<i64: 16, 128>}, {transform_indices = @transform_1, window_bounds = array<i64: 128, 128>}, {transform_indices = @transform_2, window_bounds = array<i64: 128, 128>}, {pipeline_mode = #tpu.pipeline_mode<synchronous>, transform_indices = @transform_3, window_bounds = array<i64: 1, 128>}, {transform_indices = @transform_4, window_bounds = array<i64: 128, 1>}, {transform_indices = @transform_5, window_bounds = array<i64: 1, 128>}, {transform_indices = @transform_6, window_bounds = array<i64: 16, 128>}]} {
    %c0 = arith.constant 0 : index
    %c0_0 = arith.constant 0 : index
    %0 = vector.load %arg3[%c0, %c0_0] : memref<128x128xbf16, #tpu.memory_space<vmem>>, vector<128x128xbf16>
    %c0_1 = arith.constant 0 : index
    %c0_2 = arith.constant 0 : index
    %1 = vector.load %arg4[%c0_1, %c0_2] : memref<128x128xbf16, #tpu.memory_space<vmem>>, vector<128x128xbf16>
    %c0_3 = arith.constant 0 : index
    %c0_4 = arith.constant 0 : index
    %2 = vector.load %arg6[%c0_3, %c0_4] : memref<128x1xbf16, #tpu.memory_space<vmem>>, vector<128x1xbf16>
    %c0_5 = arith.constant 0 : index
    %c0_6 = arith.constant 0 : index
    %3 = vector.load %arg5[%c0_5, %c0_6] : memref<1x128xbf16, #tpu.memory_space<vmem>>, vector<1x128xbf16>
    %4 = vector.broadcast %2 : vector<128x1xbf16> to vector<128x128xbf16>
    %5 = vector.broadcast %3 : vector<1x128xbf16> to vector<128x128xbf16>
    %6 = arith.mulf %4, %5 : vector<128x128xbf16>
    %7 = arith.mulf %1, %6 : vector<128x128xbf16>
    %8 = arith.addf %0, %7 : vector<128x128xbf16>
    %c0_7 = arith.constant 0 : index
    %c0_8 = arith.constant 0 : index
    %9 = vector.load %arg2[%c0_7, %c0_8] : memref<16x128xbf16, #tpu.memory_space<vmem>>, vector<16x128xbf16>
    %cst = arith.constant dense<0.000000e+00> : vector<16x128xf32>
    %10 = tpu.matmul %9, %8, %cst {dimension_numbers = #tpu.dot_dimension_numbers<[1], [1], [0], [0], [0, 0, 1, 0], [], []>} : vector<16x128xbf16>, vector<128x128xbf16>, vector<16x128xf32> -> vector<16x128xf32>
    %c0_9 = arith.constant 0 : index
    %c0_10 = arith.constant 0 : index
    %11 = vector.load %arg7[%c0_9, %c0_10] : memref<1x128xf32, #tpu.memory_space<vmem>>, vector<1x128xf32>
    %12 = vector.broadcast %11 : vector<1x128xf32> to vector<16x128xf32>
    %13 = arith.addf %10, %12 : vector<16x128xf32>
    %c0_11 = arith.constant 0 : index
    %c0_12 = arith.constant 0 : index
    %14 = vector.load %arg8[%c0_11, %c0_12] : memref<16x128xf32, #tpu.memory_space<vmem>>, vector<16x128xf32>
    tpu.vector_store %arg8[%c0_11, %c0_12], %13 {strides = array<i32>} : memref<16x128xf32, #tpu.memory_space<vmem>>, vector<16x128xf32>,
    return
  }
  func.func @transform_0(%arg0: i32, %arg1: i32) -> (i32, i32) {
    %c0_i32 = arith.constant 0 : i32
    %c0_i32_0 = arith.constant 0 : i32
    return %arg0, %c0_i32 : i32, i32
  }
  func.func @transform_1(%arg0: i32, %arg1: i32) -> (i32, i32) {
    %c0_i32 = arith.constant 0 : i32
    %c0_i32_0 = arith.constant 0 : i32
    return %arg1, %c0_i32 : i32, i32
  }
  func.func @transform_2(%arg0: i32, %arg1: i32) -> (i32, i32) {
    %c0_i32 = arith.constant 0 : i32
    %c0_i32_0 = arith.constant 0 : i32
    return %arg1, %c0_i32 : i32, i32
  }
  func.func @transform_3(%arg0: i32, %arg1: i32) -> (i32, i32) {
    %c0_i32 = arith.constant 0 : i32
    %c0_i32_0 = arith.constant 0 : i32
    %c0_i32_1 = arith.constant 0 : i32
    return %c0_i32, %c0_i32_0 : i32, i32
  }
  func.func @transform_4(%arg0: i32, %arg1: i32) -> (i32, i32) {
    %c0_i32 = arith.constant 0 : i32
    %c0_i32_0 = arith.constant 0 : i32
    return %arg1, %c0_i32 : i32, i32
  }
  func.func @transform_5(%arg0: i32, %arg1: i32) -> (i32, i32) {
    %c0_i32 = arith.constant 0 : i32
    %c0_i32_0 = arith.constant 0 : i32
    return %c0_i32, %arg1 : i32, i32
  }
  func.func @transform_6(%arg0: i32, %arg1: i32) -> (i32, i32) {
    %c0_i32 = arith.constant 0 : i32
    return %arg0, %arg1 : i32, i32
  }
}

</mosaic_0001>

<llo_original>
// kernel: tpu_custom_call.1
$region0: #{tpu_custom_call.1}
  #allocation0 [shape = 'u32[]', space=smem, size = 0x4, offset = 0x4, fixed_abs, tag = 'smem constant byte address 0x4 - core index']
  #allocation1 [shape = 'u32[72,128]{1,0:T(1,128)}', space=vmem, size = 0x9000, scoped, tag = 'internal scratch']
  %s0 = inlined_call_operand.hbm [shape: bf16[16,128], index: 0, kind: input, shape index: {}]
  %s1 = inlined_call_operand.vmem [shape: bf16[128,128], index: 1, kind: input, shape index: {}]
  %s2 = inlined_call_operand.hbm [shape: bf16[128,128], index: 2, kind: input, shape index: {}]
  %s3 = inlined_call_operand.vmem [shape: bf16[1,128], index: 3, kind: input, shape index: {}]
  %s4 = inlined_call_operand.vmem [shape: bf16[128,1], index: 4, kind: input, shape index: {}]
  %s5 = inlined_call_operand.vmem [shape: f32[1,128], index: 5, kind: input, shape index: {}]
  %s6 = inlined_call_operand.hbm [shape: f32[16,128], index: 6, kind: output, shape index: {}]
  %s7 = sld [smem:[#allocation0]]
  $region42: #{tpu_custom_call.1} parent=0
    _
  %s9 = ssub.s32 1, %s7
  %s10 = scalar_select 0, %s9, %s7
  $region1: #{tpu_custom_call.1} parent=0
    #allocation2 [shape = 'u8[4096]{0}', space=vmem, size = 0x1000, scoped, tag = 'input window, operand 0, single buffered']
    #allocation3 [shape = 's32[1]{0}', space=sflag, size = 0x4, scoped, tag = 'scoped memory for tpu_custom_call.1']
    #allocation4 [shape = 's32[1]{0}', space=sflag, size = 0x4, scoped, tag = 'scoped memory for tpu_custom_call.1']
    #allocation5 [shape = 'u8[32768]{0}', space=vmem, size = 0x8000, scoped, tag = 'input window, operand 2, single buffered']
    #allocation6 [shape = 's32[1]{0}', space=sflag, size = 0x4, scoped, tag = 'scoped memory for tpu_custom_call.1']
    #allocation7 [shape = 'u8[8192]{0}', space=vmem, size = 0x2000, scoped, tag = 'output window, operand 0, single buffered']
    %11 = vsyncpa [#allocation3], 0
    %12 = vsyncpa [#allocation6], 0
    %13 = vsyncpa [#allocation4], 0
    // Predicated region
    $region2: #{tpu_custom_call.1} parent=1 // pred_check
      _
    $region3: #{tpu_custom_call.1} parent=1 // pred_check_branch
      %15 = sbr.rel (0) target = $region5
    $region4: #{tpu_custom_call.1} parent=1 // pred_region
      %17 = vsyncadd [#allocation3], 0
      %s18 = sshll.u32 %s0, 4
      %s19 = int_to_ptr.hbm [resolvable:$true] %s18
      %s20 = sshll.u32 [#allocation2], 4
      %s21 = int_to_ptr.vmem [resolvable:$true] %s20
      %26 = dma.hbm_to_vmem [thread:$0]  %s19, 128, %s21, [#allocation3], 64, 64, 4
    $region5: #{tpu_custom_call.1} parent=1 // pred_fallthru
      _
    // Predicated region
    $region6: #{tpu_custom_call.1} parent=1 // pred_check
      _
    $region7: #{tpu_custom_call.1} parent=1 // pred_check_branch
      %28 = sbr.rel (0) target = $region9
    $region8: #{tpu_custom_call.1} parent=1 // pred_region
      _
    $region9: #{tpu_custom_call.1} parent=1 // pred_fallthru
      _
    // Predicated region
    $region10: #{tpu_custom_call.1} parent=1 // pred_check
      _
    $region11: #{tpu_custom_call.1} parent=1 // pred_check_branch
      %30 = sbr.rel (0) target = $region13
    $region12: #{tpu_custom_call.1} parent=1 // pred_region
      %32 = vsyncadd [#allocation6], 0
      %s33 = sshll.u32 %s2, 4
      %s34 = int_to_ptr.hbm [resolvable:$true] %s33
      %s35 = sshll.u32 [#allocation5], 4
      %s36 = int_to_ptr.vmem [resolvable:$true] %s35
      %41 = dma.hbm_to_vmem [thread:$0]  %s34, 1024, %s36, [#allocation6], 64, 64, 4
    $region13: #{tpu_custom_call.1} parent=1 // pred_fallthru
      _
    // Predicated region
    $region14: #{tpu_custom_call.1} parent=1 // pred_check
      _
    $region15: #{tpu_custom_call.1} parent=1 // pred_check_branch
      %43 = sbr.rel (0) target = $region17
    $region16: #{tpu_custom_call.1} parent=1 // pred_region
      _
    $region17: #{tpu_custom_call.1} parent=1 // pred_fallthru
      _
    // Predicated region
    $region18: #{tpu_custom_call.1} parent=1 // pred_check
      _
    $region19: #{tpu_custom_call.1} parent=1 // pred_check_branch
      %45 = sbr.rel (0) target = $region21
    $region20: #{tpu_custom_call.1} parent=1 // pred_region
      _
    $region21: #{tpu_custom_call.1} parent=1 // pred_fallthru
      _
    // Predicated region
    $region22: #{tpu_custom_call.1} parent=1 // pred_check
      _
    $region23: #{tpu_custom_call.1} parent=1 // pred_check_branch
      %47 = sbr.rel (0) target = $region25
    $region24: #{tpu_custom_call.1} parent=1 // pred_region
      _
    $region25: #{tpu_custom_call.1} parent=1 // pred_fallthru
      _
    // Predicated region
    $region26: #{tpu_custom_call.1} parent=1 // pred_check
      _
    $region27: #{tpu_custom_call.1} parent=1 // pred_check_branch
      %49 = sbr.rel (0) target = $region29
    $region28: #{tpu_custom_call.1} parent=1 // pred_region
      %51 = dma.done [#allocation3], 128
    $region29: #{tpu_custom_call.1} parent=1 // pred_fallthru
      _
    // Predicated region
    $region30: #{tpu_custom_call.1} parent=1 // pred_check
      _
    $region31: #{tpu_custom_call.1} parent=1 // pred_check_branch
      %53 = sbr.rel (0) target = $region33
    $region32: #{tpu_custom_call.1} parent=1 // pred_region
      %55 = dma.done [#allocation6], 1024
    $region33: #{tpu_custom_call.1} parent=1 // pred_fallthru
      _
    %v56 = vld [vmem:[%s1] sm:$0xf]
    %v57 = vld [vmem:[%s1 + $0x4] sm:$0xf]
    %v58 = vld [vmem:[%s1 + $0x8] sm:$0xf]
    %v59 = vld [vmem:[%s1 + $0xc] sm:$0xf]
    %v60 = vld [vmem:[%s1 + $0x10] sm:$0xf]
    %v61 = vld [vmem:[%s1 + $0x14] sm:$0xf]
    %v62 = vld [vmem:[%s1 + $0x18] sm:$0xf]
    %v63 = vld [vmem:[%s1 + $0x1c] sm:$0xf]
    %v64 = vld [vmem:[%s1 + $0x20] sm:$0xf]
    %v65 = vld [vmem:[%s1 + $0x24] sm:$0xf]
    %v66 = vld [vmem:[%s1 + $0x28] sm:$0xf]
    %v67 = vld [vmem:[%s1 + $0x2c] sm:$0xf]
    %v68 = vld [vmem:[%s1 + $0x30] sm:$0xf]
    %v69 = vld [vmem:[%s1 + $0x34] sm:$0xf]
    %v70 = vld [vmem:[%s1 + $0x38] sm:$0xf]
    %v71 = vld [vmem:[%s1 + $0x3c] sm:$0xf]
    %v72 = vld [vmem:[#allocation5] sm:$0xf]
    %v73 = vld [vmem:[#allocation5 + $0x4] sm:$0xf]
    %v74 = vld [vmem:[#allocation5 + $0x8] sm:$0xf]
    %v75 = vld [vmem:[#allocation5 + $0xc] sm:$0xf]
    %v76 = vld [vmem:[#allocation5 + $0x10] sm:$0xf]
    %v77 = vld [vmem:[#allocation5 + $0x14] sm:$0xf]
    %v78 = vld [vmem:[#allocation5 + $0x18] sm:$0xf]
    %v79 = vld [vmem:[#allocation5 + $0x1c] sm:$0xf]
    %v80 = vld [vmem:[#allocation5 + $0x20] sm:$0xf]
    %v81 = vld [vmem:[#allocation5 + $0x24] sm:$0xf]
    %v82 = vld [vmem:[#allocation5 + $0x28] sm:$0xf]
    %v83 = vld [vmem:[#allocation5 + $0x2c] sm:$0xf]
    %v84 = vld [vmem:[#allocation5 + $0x30] sm:$0xf]
    %v85 = vld [vmem:[#allocation5 + $0x34] sm:$0xf]
    %v86 = vld [vmem:[#allocation5 + $0x38] sm:$0xf]
    %v87 = vld [vmem:[#allocation5 + $0x3c] sm:$0xf]
    %v88 = vld [vmem:[%s4] sm:$0xf]
    %v89 = vld [vmem:[%s4 + $0x4] sm:$0xf]
    %v90 = vld [vmem:[%s4 + $0x8] sm:$0xf]
    %v91 = vld [vmem:[%s4 + $0xc] sm:$0xf]
    %v92 = vld [vmem:[%s4 + $0x10] sm:$0xf]
    %v93 = vld [vmem:[%s4 + $0x14] sm:$0xf]
    %v94 = vld [vmem:[%s4 + $0x18] sm:$0xf]
    %v95 = vld [vmem:[%s4 + $0x1c] sm:$0xf]
    %v96 = vld [vmem:[%s4 + $0x20] sm:$0xf]
    %v97 = vld [vmem:[%s4 + $0x24] sm:$0xf]
    %v98 = vld [vmem:[%s4 + $0x28] sm:$0xf]
    %v99 = vld [vmem:[%s4 + $0x2c] sm:$0xf]
    %v100 = vld [vmem:[%s4 + $0x30] sm:$0xf]
    %v101 = vld [vmem:[%s4 + $0x34] sm:$0xf]
    %v102 = vld [vmem:[%s4 + $0x38] sm:$0xf]
    %v103 = vld [vmem:[%s4 + $0x3c] sm:$0xf]
    %v104 = vld [vmem:[%s3] sm:$0x1]
    %106 = vset.pattern.permute.xlu0 0
    %107 = vperm.xlu0 %106, %v88
    %v108 = vpop.permute.xlu0 %107
    %v111 = vunpack.c.l.s4 839922192
    %v112 = vunpack.c.0.s8 %v111
    %v113 = vperm.slane %v108, %v112
    %115 = vset.pattern.permute.xlu0 0
    %116 = vperm.xlu0 %115, %v89
    %v117 = vpop.permute.xlu0 %116
    %v120 = vunpack.c.l.s4 839922192
    %v121 = vunpack.c.0.s8 %v120
    %v122 = vperm.slane %v117, %v121
    %124 = vset.pattern.permute.xlu0 0
    %125 = vperm.xlu0 %124, %v90
    %v126 = vpop.permute.xlu0 %125
    %v129 = vunpack.c.l.s4 839922192
    %v130 = vunpack.c.0.s8 %v129
    %v131 = vperm.slane %v126, %v130
    %133 = vset.pattern.permute.xlu0 0
    %134 = vperm.xlu0 %133, %v91
    %v135 = vpop.permute.xlu0 %134
    %v138 = vunpack.c.l.s4 839922192
    %v139 = vunpack.c.0.s8 %v138
    %v140 = vperm.slane %v135, %v139
    %142 = vset.pattern.permute.xlu0 0
    %143 = vperm.xlu0 %142, %v92
    %v144 = vpop.permute.xlu0 %143
    %v147 = vunpack.c.l.s4 839922192
    %v148 = vunpack.c.0.s8 %v147
    %v149 = vperm.slane %v144, %v148
    %151 = vset.pattern.permute.xlu0 0
    %152 = vperm.xlu0 %151, %v93
    %v153 = vpop.permute.xlu0 %152
    %v156 = vunpack.c.l.s4 839922192
    %v157 = vunpack.c.0.s8 %v156
    %v158 = vperm.slane %v153, %v157
    %160 = vset.pattern.permute.xlu0 0
    %161 = vperm.xlu0 %160, %v94
    %v162 = vpop.permute.xlu0 %161
    %v165 = vunpack.c.l.s4 839922192
    %v166 = vunpack.c.0.s8 %v165
    %v167 = vperm.slane %v162, %v166
    %169 = vset.pattern.permute.xlu0 0
    %170 = vperm.xlu0 %169, %v95
    %v171 = vpop.permute.xlu0 %170
    %v174 = vunpack.c.l.s4 839922192
    %v175 = vunpack.c.0.s8 %v174
    %v176 = vperm.slane %v171, %v175
    %178 = vset.pattern.permute.xlu0 0
    %179 = vperm.xlu0 %178, %v96
    %v180 = vpop.permute.xlu0 %179
    %v183 = vunpack.c.l.s4 839922192
    %v184 = vunpack.c.0.s8 %v183
    %v185 = vperm.slane %v180, %v184
    %187 = vset.pattern.permute.xlu0 0
    %188 = vperm.xlu0 %187, %v97
    %v189 = vpop.permute.xlu0 %188
    %v192 = vunpack.c.l.s4 839922192
    %v193 = vunpack.c.0.s8 %v192
    %v194 = vperm.slane %v189, %v193
    %196 = vset.pattern.permute.xlu0 0
    %197 = vperm.xlu0 %196, %v98
    %v198 = vpop.permute.xlu0 %197
    %v201 = vunpack.c.l.s4 839922192
    %v202 = vunpack.c.0.s8 %v201
    %v203 = vperm.slane %v198, %v202
    %205 = vset.pattern.permute.xlu0 0
    %206 = vperm.xlu0 %205, %v99
    %v207 = vpop.permute.xlu0 %206
    %v210 = vunpack.c.l.s4 839922192
    %v211 = vunpack.c.0.s8 %v210
    %v212 = vperm.slane %v207, %v211
    %214 = vset.pattern.permute.xlu0 0
    %215 = vperm.xlu0 %214, %v100
    %v216 = vpop.permute.xlu0 %215
    %v219 = vunpack.c.l.s4 839922192
    %v220 = vunpack.c.0.s8 %v219
    %v221 = vperm.slane %v216, %v220
    %223 = vset.pattern.permute.xlu0 0
    %224 = vperm.xlu0 %223, %v101
    %v225 = vpop.permute.xlu0 %224
    %v228 = vunpack.c.l.s4 839922192
    %v229 = vunpack.c.0.s8 %v228
    %v230 = vperm.slane %v225, %v229
    %232 = vset.pattern.permute.xlu0 0
    %233 = vperm.xlu0 %232, %v102
    %v234 = vpop.permute.xlu0 %233
    %v237 = vunpack.c.l.s4 839922192
    %v238 = vunpack.c.0.s8 %v237
    %v239 = vperm.slane %v234, %v238
    %241 = vset.pattern.permute.xlu0 0
    %242 = vperm.xlu0 %241, %v103
    %v243 = vpop.permute.xlu0 %242
    %v246 = vunpack.c.l.s4 839922192
    %v247 = vunpack.c.0.s8 %v246
    %v248 = vperm.slane %v243, %v247
    %v250 = vpack.i.b16 %v104, %v104
    %v252 = vperm.slane %v250, 0
    %v253 = vunpack.c.l.bf16 %v113
    %v254 = vunpack.c.l.bf16 %v122
    %v255 = vunpack.c.l.bf16 %v131
    %v256 = vunpack.c.l.bf16 %v140
    %v257 = vunpack.c.l.bf16 %v149
    %v258 = vunpack.c.l.bf16 %v158
    %v259 = vunpack.c.l.bf16 %v167
    %v260 = vunpack.c.l.bf16 %v176
    %v261 = vunpack.c.l.bf16 %v185
    %v262 = vunpack.c.l.bf16 %v194
    %v263 = vunpack.c.l.bf16 %v203
    %v264 = vunpack.c.l.bf16 %v212
    %v265 = vunpack.c.l.bf16 %v221
    %v266 = vunpack.c.l.bf16 %v230
    %v267 = vunpack.c.l.bf16 %v239
    %v268 = vunpack.c.l.bf16 %v248
    %v269 = vunpack.c.l.bf16 %v252
    %v270 = vmul.f32 %v253, %v269
    %v271 = vmul.f32 %v254, %v269
    %v272 = vmul.f32 %v255, %v269
    %v273 = vmul.f32 %v256, %v269
    %v274 = vmul.f32 %v257, %v269
    %v275 = vmul.f32 %v258, %v269
    %v276 = vmul.f32 %v259, %v269
    %v277 = vmul.f32 %v260, %v269
    %v278 = vmul.f32 %v261, %v269
    %v279 = vmul.f32 %v262, %v269
    %v280 = vmul.f32 %v263, %v269
    %v281 = vmul.f32 %v264, %v269
    %v282 = vmul.f32 %v265, %v269
    %v283 = vmul.f32 %v266, %v269
    %v284 = vmul.f32 %v267, %v269
    %v285 = vmul.f32 %v268, %v269
    %v286 = vpack.c.bf16 %v270, %v270
    %v287 = vpack.c.bf16 %v271, %v271
    %v288 = vpack.c.bf16 %v272, %v272
    %v289 = vpack.c.bf16 %v273, %v273
    %v290 = vpack.c.bf16 %v274, %v274
    %v291 = vpack.c.bf16 %v275, %v275
    %v292 = vpack.c.bf16 %v276, %v276
    %v293 = vpack.c.bf16 %v277, %v277
    %v294 = vpack.c.bf16 %v278, %v278
    %v295 = vpack.c.bf16 %v279, %v279
    %v296 = vpack.c.bf16 %v280, %v280
    %v297 = vpack.c.bf16 %v281, %v281
    %v298 = vpack.c.bf16 %v282, %v282
    %v299 = vpack.c.bf16 %v283, %v283
    %v300 = vpack.c.bf16 %v284, %v284
    %v301 = vpack.c.bf16 %v285, %v285
    %v302 = vunpack.c.l.bf16 %v72
    %v303 = vunpack.c.l.bf16 %v73
    %v304 = vunpack.c.l.bf16 %v74
    %v305 = vunpack.c.l.bf16 %v75
    %v306 = vunpack.c.l.bf16 %v76
    %v307 = vunpack.c.l.bf16 %v77
    %v308 = vunpack.c.l.bf16 %v78
    %v309 = vunpack.c.l.bf16 %v79
    %v310 = vunpack.c.l.bf16 %v80
    %v311 = vunpack.c.l.bf16 %v81
    %v312 = vunpack.c.l.bf16 %v82
    %v313 = vunpack.c.l.bf16 %v83
    %v314 = vunpack.c.l.bf16 %v84
    %v315 = vunpack.c.l.bf16 %v85
    %v316 = vunpack.c.l.bf16 %v86
    %v317 = vunpack.c.l.bf16 %v87
    %v318 = vunpack.c.l.bf16 %v286
    %v319 = vunpack.c.l.bf16 %v287
    %v320 = vunpack.c.l.bf16 %v288
    %v321 = vunpack.c.l.bf16 %v289
    %v322 = vunpack.c.l.bf16 %v290
    %v323 = vunpack.c.l.bf16 %v291
    %v324 = vunpack.c.l.bf16 %v292
    %v325 = vunpack.c.l.bf16 %v293
    %v326 = vunpack.c.l.bf16 %v294
    %v327 = vunpack.c.l.bf16 %v295
    %v328 = vunpack.c.l.bf16 %v296
    %v329 = vunpack.c.l.bf16 %v297
    %v330 = vunpack.c.l.bf16 %v298
    %v331 = vunpack.c.l.bf16 %v299
    %v332 = vunpack.c.l.bf16 %v300
    %v333 = vunpack.c.l.bf16 %v301
    %v334 = vmul.f32 %v302, %v318
    %v335 = vmul.f32 %v303, %v319
    %v336 = vmul.f32 %v304, %v320
    %v337 = vmul.f32 %v305, %v321
    %v338 = vmul.f32 %v306, %v322
    %v339 = vmul.f32 %v307, %v323
    %v340 = vmul.f32 %v308, %v324
    %v341 = vmul.f32 %v309, %v325
    %v342 = vmul.f32 %v310, %v326
    %v343 = vmul.f32 %v311, %v327
    %v344 = vmul.f32 %v312, %v328
    %v345 = vmul.f32 %v313, %v329
    %v346 = vmul.f32 %v314, %v330
    %v347 = vmul.f32 %v315, %v331
    %v348 = vmul.f32 %v316, %v332
    %v349 = vmul.f32 %v317, %v333
    %v350 = vpack.c.bf16 %v334, %v334
    %v351 = vpack.c.bf16 %v335, %v335
    %v352 = vpack.c.bf16 %v336, %v336
    %v353 = vpack.c.bf16 %v337, %v337
    %v354 = vpack.c.bf16 %v338, %v338
    %v355 = vpack.c.bf16 %v339, %v339
    %v356 = vpack.c.bf16 %v340, %v340
    %v357 = vpack.c.bf16 %v341, %v341
    %v358 = vpack.c.bf16 %v342, %v342
    %v359 = vpack.c.bf16 %v343, %v343
    %v360 = vpack.c.bf16 %v344, %v344
    %v361 = vpack.c.bf16 %v345, %v345
    %v362 = vpack.c.bf16 %v346, %v346
    %v363 = vpack.c.bf16 %v347, %v347
    %v364 = vpack.c.bf16 %v348, %v348
    %v365 = vpack.c.bf16 %v349, %v349
    %v366 = vunpack.c.l.bf16 %v56
    %v367 = vunpack.c.l.bf16 %v57
    %v368 = vunpack.c.l.bf16 %v58
    %v369 = vunpack.c.l.bf16 %v59
    %v370 = vunpack.c.l.bf16 %v60
    %v371 = vunpack.c.l.bf16 %v61
    %v372 = vunpack.c.l.bf16 %v62
    %v373 = vunpack.c.l.bf16 %v63
    %v374 = vunpack.c.l.bf16 %v64
    %v375 = vunpack.c.l.bf16 %v65
    %v376 = vunpack.c.l.bf16 %v66
    %v377 = vunpack.c.l.bf16 %v67
    %v378 = vunpack.c.l.bf16 %v68
    %v379 = vunpack.c.l.bf16 %v69
    %v380 = vunpack.c.l.bf16 %v70
    %v381 = vunpack.c.l.bf16 %v71
    %v382 = vunpack.c.l.bf16 %v350
    %v383 = vunpack.c.l.bf16 %v351
    %v384 = vunpack.c.l.bf16 %v352
    %v385 = vunpack.c.l.bf16 %v353
    %v386 = vunpack.c.l.bf16 %v354
    %v387 = vunpack.c.l.bf16 %v355
    %v388 = vunpack.c.l.bf16 %v356
    %v389 = vunpack.c.l.bf16 %v357
    %v390 = vunpack.c.l.bf16 %v358
    %v391 = vunpack.c.l.bf16 %v359
    %v392 = vunpack.c.l.bf16 %v360
    %v393 = vunpack.c.l.bf16 %v361
    %v394 = vunpack.c.l.bf16 %v362
    %v395 = vunpack.c.l.bf16 %v363
    %v396 = vunpack.c.l.bf16 %v364
    %v397 = vunpack.c.l.bf16 %v365
    %v398 = vadd.f32 %v366, %v382
    %v399 = vadd.f32 %v367, %v383
    %v400 = vadd.f32 %v368, %v384
    %v401 = vadd.f32 %v369, %v385
    %v402 = vadd.f32 %v370, %v386
    %v403 = vadd.f32 %v371, %v387
    %v404 = vadd.f32 %v372, %v388
    %v405 = vadd.f32 %v373, %v389
    %v406 = vadd.f32 %v374, %v390
    %v407 = vadd.f32 %v375, %v391
    %v408 = vadd.f32 %v376, %v392
    %v409 = vadd.f32 %v377, %v393
    %v410 = vadd.f32 %v378, %v394
    %v411 = vadd.f32 %v379, %v395
    %v412 = vadd.f32 %v380, %v396
    %v413 = vadd.f32 %v381, %v397
    %v414 = vpack.c.bf16 %v399, %v398
    %v415 = vpack.c.bf16 %v401, %v400
    %v416 = vpack.c.bf16 %v403, %v402
    %v417 = vpack.c.bf16 %v405, %v404
    %v418 = vpack.c.bf16 %v407, %v406
    %v419 = vpack.c.bf16 %v409, %v408
    %v420 = vpack.c.bf16 %v411, %v410
    %v421 = vpack.c.bf16 %v413, %v412
    %v422 = vld [vmem:[#allocation2] sm:$0xf]
    %v423 = vld [vmem:[#allocation2 + $0x4] sm:$0xf]
    %v424 = vld [vmem:[%s5] sm:$0x1]
    %v426 = vperm.slane %v424, 0
    %v430 = vunpack.c.l.b16 %v422
    %v431 = vunpack.c.l.b16 %v423
    %v432 = vpack.c.b16 %v431, %v430
    %434 = vmatpush.bf16.xpose.msra.mxu0 %v421
    %435 = vmatpush.bf16.xpose.msra.mxu0 %v420
    %436 = vmatpush.bf16.xpose.msra.mxu0 %v419
    %437 = vmatpush.bf16.xpose.msra.mxu0 %v418
    %438 = vmatpush.bf16.xpose.msra.mxu0 %v417
    %439 = vmatpush.bf16.xpose.msra.mxu0 %v416
    %440 = vmatpush.bf16.xpose.msra.mxu0 %v415
    %441 = vmatpush.bf16.xpose.msra.mxu0 %v414
    %442 = vmatmul.bf16.gmra.mxu0 %v432
    %v443 = vpop.f32.mrf.mxu0
    %v444 = vadd.f32 %v426, %v443
    %v445 = vpop.f32.mrf.mxu0
    %v446 = vadd.f32 %v426, %v445
    %447 = vdwg.mxu0
    %448 = vst [vmem:[#allocation7] sm:$0xff] %v444
    %449 = vst [vmem:[#allocation7 + $0x8] sm:$0xff] %v446
    // Predicated region
    $region34: #{tpu_custom_call.1} parent=1 // pred_check
      _
    $region35: #{tpu_custom_call.1} parent=1 // pred_check_branch
      %451 = sbr.rel (0) target = $region37
    $region36: #{tpu_custom_call.1} parent=1 // pred_region
      %453 = vsyncadd [#allocation4], 0
      %s454 = sshll.u32 [#allocation7], 4
      %s455 = int_to_ptr.vmem [resolvable:$true] %s454
      %s456 = sshll.u32 %s6, 4
      %s457 = int_to_ptr.hbm [resolvable:$true] %s456
      %462 = dma.vmem_to_hbm [thread:$0]  %s455, 256, %s457, [#allocation4], 128, 128, 8
    $region37: #{tpu_custom_call.1} parent=1 // pred_fallthru
      _
    // Predicated region
    $region38: #{tpu_custom_call.1} parent=1 // pred_check
      _
    $region39: #{tpu_custom_call.1} parent=1 // pred_check_branch
      %464 = sbr.rel (0) target = $region41
    $region40: #{tpu_custom_call.1} parent=1 // pred_region
      %466 = dma.done [#allocation4], 256
    $region41: #{tpu_custom_call.1} parent=1 // pred_fallthru
      _
    %467 = vsyncpa [#allocation3], 1
    %468 = vsyncpa [#allocation6], 1
    %469 = vsyncpa [#allocation4], 1

</llo_original>
